<compile_context>
chip_gen: v7x
topology: tpu7x:2x2x1
jax: 0.10.0
libtpu: 0.0.40
codegen_flags: <defaults>
</compile_context>

<pallas_src>
import functools

import jax
import jax.numpy as jnp
from jax.experimental import pallas as pl
from jax.experimental.pallas import tpu as pltpu

_LANE = 128
_VMEM_LIMIT = 48 * 1024 * 1024  # explicit limit; safe on v5e/v6e/v7x


def _round_up(x, m):
    return ((x + m - 1) // m) * m


# ----------------------------------------------------------------------------
# Fused GCN layer kernel:  Y = A @ (X @ W) + b   (ReLU optional)
#   grid = (row tiles, reduction tiles); reduction axis last ("arbitrary").
#   Output block is revisited across k and used directly as the accumulator.
# ----------------------------------------------------------------------------
def _gcn_layer_kernel(a_ref, x_ref, w_ref, b_ref, o_ref, *, apply_relu):
    k = pl.program_id(1)

    @pl.when(k == 0)
    def _():
        # Bias folded into the accumulator init (added exactly once).
        o_ref[...] = jnp.broadcast_to(b_ref[...], o_ref.shape)

    # H_k = X[k-tile] @ W  computed on the fly (W resident in VMEM).
    h_k = jnp.dot(x_ref[...], w_ref[...], preferred_element_type=jnp.float32)
    o_ref[...] += jnp.dot(a_ref[...], h_k, preferred_element_type=jnp.float32)

    if apply_relu:
        @pl.when(k == pl.num_programs(1) - 1)
        def _():
            o_ref[...] = jnp.maximum(o_ref[...], 0.0)


def gcn_layer(adj, x, w, b, *, apply_relu, tm, tk):
    """One GCNConv (normalize=False): A @ (X @ W) + b, optional ReLU.

    `adj` and `x` are node-padded to n_p; the weight is zero-padded to match
    x's (possibly lane-padded) channel count and to a full 128-lane output
    slab.  Padded adjacency rows/cols are zero, so padded node rows of the
    output (which hold relu(b)) never contribute to the next layer.
    """
    n_p = adj.shape[0]
    c_in_x = x.shape[1]                 # possibly already lane-padded
    c_in_w, c_out = w.shape
    c_out_p = _round_up(c_out, _LANE)

    w_p = jnp.zeros((c_in_x, c_out_p), jnp.float32).at[:c_in_w, :c_out].set(w)
    b_p = jnp.zeros((1, c_out_p), jnp.float32).at[0, :c_out].set(b)

    kernel = functools.partial(_gcn_layer_kernel, apply_relu=apply_relu)
    return pl.pallas_call(
        kernel,
        out_shape=jax.ShapeDtypeStruct((n_p, c_out_p), jnp.float32),
        grid=(n_p // tm, n_p // tk),
        in_specs=[
            pl.BlockSpec((tm, tk), lambda i, k: (i, k)),          # A tile
            pl.BlockSpec((tk, c_in_x), lambda i, k: (k, 0)),      # X tile
            pl.BlockSpec((c_in_x, c_out_p), lambda i, k: (0, 0)),  # W resident
            pl.BlockSpec((1, c_out_p), lambda i, k: (0, 0)),      # bias
        ],
        out_specs=pl.BlockSpec((tm, c_out_p), lambda i, k: (i, 0)),
        compiler_params=pltpu.CompilerParams(
            dimension_semantics=("parallel", "arbitrary"),
            vmem_limit_bytes=_VMEM_LIMIT,
        ),
    )(adj, x, w_p, b_p)


# ----------------------------------------------------------------------------
# Adjacency build (XLA side) and model wrapper
# ----------------------------------------------------------------------------
def dense_adjacencies(edge_index, edge_weight, n_padded):
    """Both A[dst, src] matrices (weighted and unit) with a single scatter."""
    src = edge_index[0]
    dst = edge_index[1]
    payload = jnp.stack([edge_weight, jnp.ones_like(edge_weight)], axis=-1)
    buf = jnp.zeros((n_padded, n_padded, 2), jnp.float32).at[dst, src].add(payload)
    return buf[..., 0], buf[..., 1]


def _pick_tiles(n):
    """Lane-aligned tiles, cap 1024; >=2 row tiles for v7x megacore."""
    tk = min(1024, _round_up(n, _LANE))
    n_p = _round_up(n, tk)
    tm = tk
    if n_p // tm < 2:
        tm = n_p // 2          # n_p is a multiple of 128 -> tm multiple of 64
    return n_p, tm, tk


def gcn_forward(x, edge_index, edge_weight, params):
    n, c_in = x.shape
    n_p, tm, tk = _pick_tiles(n)

    x_p = jnp.zeros((n_p, c_in), jnp.float32).at[:n, :].set(x)

    # conv1 uses the provided edge weights; conv2 is called without
    # edge_weight in the PyTorch module => implicit weight 1.0 per edge.
    adj_w, adj_1 = dense_adjacencies(edge_index, edge_weight, n_p)

    # dropout(p=0.5, training=False) -> identity
    h = gcn_layer(adj_w, x_p, params["w1"], params["b1"],
                  apply_relu=True, tm=tm, tk=tk)
    # dropout(p=0.5, training=False) -> identity
    out_p = gcn_layer(adj_1, h, params["w2"], params["b2"],
                      apply_relu=False, tm=tm, tk=tk)

    c_out = params["w2"].shape[1]
    return out_p[:n, :c_out]


if __name__ == "__main__":
    num_nodes = 64
    num_edges = 256
    in_channels, hidden_channels, out_channels = 16, 32, 8

    key = jax.random.PRNGKey(0)
    kx, ke, kw, kw1, kw2 = jax.random.split(key, 5)

    x = jax.random.normal(kx, (num_nodes, in_channels), jnp.float32)
    edge_index = jax.random.randint(ke, (2, num_edges), 0, num_nodes, jnp.int32)
    edge_weight = jax.random.uniform(kw, (num_edges,), jnp.float32)

    params = {
        "w1": jax.random.normal(kw1, (in_channels, hidden_channels), jnp.float32)
        * (1.0 / jnp.sqrt(in_channels)),
        "b1": jnp.zeros((hidden_channels,), jnp.float32),
        "w2": jax.random.normal(kw2, (hidden_channels, out_channels), jnp.float32)
        * (1.0 / jnp.sqrt(hidden_channels)),
        "b2": jnp.zeros((out_channels,), jnp.float32),
    }

    out = gcn_forward(x, edge_index, edge_weight, params)
    jax.block_until_ready(out)
    assert out.shape == (num_nodes, out_channels)

    # Pure-JAX reference (dense): A_1 @ (relu(A_w @ (X W1) + b1) W2) + b2
    a_w = jnp.zeros((num_nodes, num_nodes), jnp.float32).at[
        edge_index[1], edge_index[0]].add(edge_weight)
    a_1 = jnp.zeros((num_nodes, num_nodes), jnp.float32).at[
        edge_index[1], edge_index[0]].add(jnp.ones_like(edge_weight))
    h_ref = jnp.maximum(a_w @ (x @ params["w1"]) + params["b1"], 0.0)
    ref = a_1 @ (h_ref @ params["w2"]) + params["b2"]
    assert jnp.allclose(out, ref, atol=1e-3, rtol=1e-3), float(
        jnp.max(jnp.abs(out - ref)))

    print("KERNEL_OK")
</pallas_src>

<mosaic_0001>
module attributes {stable_mosaic.version = 11 : i64} {
  func.func @_gcn_layer_kernel(%arg0: i32, %arg1: i32, %arg2: memref<64x128xf32, #tpu.memory_space<vmem>>, %arg3: memref<128x16xf32, #tpu.memory_space<vmem>>, %arg4: memref<16x128xf32, #tpu.memory_space<vmem>>, %arg5: memref<1x128xf32, #tpu.memory_space<vmem>>, %arg6: memref<64x128xf32, #tpu.memory_space<vmem>>) attributes {dimension_semantics = [#tpu.dimension_semantics<parallel>, #tpu.dimension_semantics<arbitrary>], iteration_bounds = array<i64: 2, 1>, scalar_prefetch = 0 : i64, scratch_operands = 0 : i64, tpu.core_type = #tpu.core_type<tc>, window_params = [{transform_indices = @transform_0, window_bounds = array<i64: 64, 128>}, {transform_indices = @transform_1, window_bounds = array<i64: 128, 16>}, {pipeline_mode = #tpu.pipeline_mode<synchronous>, transform_indices = @transform_2, window_bounds = array<i64: 16, 128>}, {pipeline_mode = #tpu.pipeline_mode<synchronous>, transform_indices = @transform_3, window_bounds = array<i64: 1, 128>}, {transform_indices = @transform_4, window_bounds = array<i64: 64, 128>}]} {
    %c0_i32 = arith.constant 0 : i32
    %0 = arith.cmpi eq, %arg1, %c0_i32 : i32
    %1 = arith.extui %0 : i1 to i32
    %c0_i32_0 = arith.constant 0 : i32
    %2 = arith.cmpi ne, %1, %c0_i32_0 : i32
    scf.if %2 {
      %c0_13 = arith.constant 0 : index
      %c0_14 = arith.constant 0 : index
      %14 = vector.load %arg5[%c0_13, %c0_14] : memref<1x128xf32, #tpu.memory_space<vmem>>, vector<1x128xf32>
      %15 = vector.shape_cast %14 : vector<1x128xf32> to vector<1x128xf32>
      %16 = vector.broadcast %15 : vector<1x128xf32> to vector<64x128xf32>
      %c0_15 = arith.constant 0 : index
      %c0_16 = arith.constant 0 : index
      %17 = vector.load %arg6[%c0_15, %c0_16] : memref<64x128xf32, #tpu.memory_space<vmem>>, vector<64x128xf32>
      tpu.vector_store %arg6[%c0_15, %c0_16], %16 {strides = array<i32>} : memref<64x128xf32, #tpu.memory_space<vmem>>, vector<64x128xf32>,
    } else {
    }
    %c0 = arith.constant 0 : index
    %c0_1 = arith.constant 0 : index
    %3 = vector.load %arg3[%c0, %c0_1] : memref<128x16xf32, #tpu.memory_space<vmem>>, vector<128x16xf32>
    %c0_2 = arith.constant 0 : index
    %c0_3 = arith.constant 0 : index
    %4 = vector.load %arg4[%c0_2, %c0_3] : memref<16x128xf32, #tpu.memory_space<vmem>>, vector<16x128xf32>
    %cst = arith.constant dense<0.000000e+00> : vector<128x128xf32>
    %5 = tpu.matmul %3, %4, %cst {dimension_numbers = #tpu.dot_dimension_numbers<[1], [0], [0], [1], [0, 0, 1, 1], [], []>} : vector<128x16xf32>, vector<16x128xf32>, vector<128x128xf32> -> vector<128x128xf32>
    %c0_4 = arith.constant 0 : index
    %c0_5 = arith.constant 0 : index
    %6 = vector.load %arg6[%c0_4, %c0_5] : memref<64x128xf32, #tpu.memory_space<vmem>>, vector<64x128xf32>
    %c0_6 = arith.constant 0 : index
    %c0_7 = arith.constant 0 : index
    %7 = vector.load %arg2[%c0_6, %c0_7] : memref<64x128xf32, #tpu.memory_space<vmem>>, vector<64x128xf32>
    %cst_8 = arith.constant dense<0.000000e+00> : vector<64x128xf32>
    %8 = tpu.matmul %7, %5, %cst_8 {dimension_numbers = #tpu.dot_dimension_numbers<[1], [0], [0], [1], [0, 0, 1, 1], [], []>} : vector<64x128xf32>, vector<128x128xf32>, vector<64x128xf32> -> vector<64x128xf32>
    %9 = arith.addf %6, %8 : vector<64x128xf32>
    %c0_9 = arith.constant 0 : index
    %c0_10 = arith.constant 0 : index
    %10 = vector.load %arg6[%c0_9, %c0_10] : memref<64x128xf32, #tpu.memory_space<vmem>>, vector<64x128xf32>
    tpu.vector_store %arg6[%c0_9, %c0_10], %9 {strides = array<i32>} : memref<64x128xf32, #tpu.memory_space<vmem>>, vector<64x128xf32>,
    %c0_i32_11 = arith.constant 0 : i32
    %11 = arith.cmpi eq, %arg1, %c0_i32_11 : i32
    %12 = arith.extui %11 : i1 to i32
    %c0_i32_12 = arith.constant 0 : i32
    %13 = arith.cmpi ne, %12, %c0_i32_12 : i32
    scf.if %13 {
      %c0_13 = arith.constant 0 : index
      %c0_14 = arith.constant 0 : index
      %14 = vector.load %arg6[%c0_13, %c0_14] : memref<64x128xf32, #tpu.memory_space<vmem>>, vector<64x128xf32>
      %cst_15 = arith.constant 0.000000e+00 : f32
      %15 = vector.broadcast %cst_15 : f32 to vector<64x128xf32>
      %16 = arith.maximumf %14, %15 : vector<64x128xf32>
      %c0_16 = arith.constant 0 : index
      %c0_17 = arith.constant 0 : index
      %17 = vector.load %arg6[%c0_16, %c0_17] : memref<64x128xf32, #tpu.memory_space<vmem>>, vector<64x128xf32>
      tpu.vector_store %arg6[%c0_16, %c0_17], %16 {strides = array<i32>} : memref<64x128xf32, #tpu.memory_space<vmem>>, vector<64x128xf32>,
    } else {
    }
    return
  }
  func.func @transform_0(%arg0: i32, %arg1: i32) -> (i32, i32) {
    %c0_i32 = arith.constant 0 : i32
    return %arg0, %arg1 : i32, i32
  }
  func.func @transform_1(%arg0: i32, %arg1: i32) -> (i32, i32) {
    %c0_i32 = arith.constant 0 : i32
    %c0_i32_0 = arith.constant 0 : i32
    return %arg1, %c0_i32 : i32, i32
  }
  func.func @transform_2(%arg0: i32, %arg1: i32) -> (i32, i32) {
    %c0_i32 = arith.constant 0 : i32
    %c0_i32_0 = arith.constant 0 : i32
    %c0_i32_1 = arith.constant 0 : i32
    return %c0_i32, %c0_i32_0 : i32, i32
  }
  func.func @transform_3(%arg0: i32, %arg1: i32) -> (i32, i32) {
    %c0_i32 = arith.constant 0 : i32
    %c0_i32_0 = arith.constant 0 : i32
    %c0_i32_1 = arith.constant 0 : i32
    return %c0_i32, %c0_i32_0 : i32, i32
  }
  func.func @transform_4(%arg0: i32, %arg1: i32) -> (i32, i32) {
    %c0_i32 = arith.constant 0 : i32
    %c0_i32_0 = arith.constant 0 : i32
    return %arg0, %c0_i32 : i32, i32
  }
}

</mosaic_0001>

<llo_original>
// kernel: tpu_custom_call.1
$region0: #{tpu_custom_call.1}
  #allocation0 [shape = 'u32[]', space=smem, size = 0x4, offset = 0x4, fixed_abs, tag = 'smem constant byte address 0x4 - core index']
  #allocation1 [shape = 'u32[144,128]{1,0:T(1,128)}', space=vmem, size = 0x12000, scoped, tag = 'internal scratch']
  %s0 = inlined_call_operand.vmem [shape: f32[128,128], index: 0, kind: input, shape index: {}]
  %s1 = inlined_call_operand.vmem [shape: f32[128,16], index: 1, kind: input, shape index: {}]
  %s2 = inlined_call_operand.vmem [shape: f32[16,128], index: 2, kind: input, shape index: {}]
  %s3 = inlined_call_operand.vmem [shape: f32[1,128], index: 3, kind: input, shape index: {}]
  %s4 = inlined_call_operand.hbm [shape: f32[128,128], index: 4, kind: output, shape index: {}]
  %s5 = sld [smem:[#allocation0]]
  $region57: #{tpu_custom_call.1} parent=0
    _
  %s7 = ssub.s32 1, %s5
  %s8 = scalar_select 0, %s7, %s5
  $region1: #{tpu_custom_call.1} parent=0
    #allocation2 [shape = 'u8[65536]{0}', space=vmem, size = 0x10000, scoped, tag = 'output window, operand 0']
    #allocation3 [shape = 's32[2]{0}', space=sflag, size = 0x8, scoped, tag = 'scoped memory for tpu_custom_call.1']
    %9 = vsyncpa [#allocation3], 0
    %s10 = scalar_lea.sflag [#allocation3], 1
    %11 = vsyncpa %s10, 0
    loop: start=0, step=1, limit=4
    $region2: #{tpu_custom_call.1} parent=1 // loop_pre_header
      _
    $region3: #{tpu_custom_call.1} parent=1 // loop_header
      %s13 = sphi 0, %s17
      %p14 = scmp.ge.s32.totalorder %s13, 4
      %s20 = sphi 0, %s32
      %s21 = sphi 0, %s28
      %s22 = sphi 0, %s20
      %s23 = sphi 0, %s21
      %s24 = sphi 0, %s22
      %s25 = sphi 0, %s23
      %s37 = sphi 0, %s39
      %s40 = sphi 0, %s37
      %s41 = sphi 0, %s40
      %s57 = sphi 0, %s41
      %s63 = sphi 0, %s65
      %s66 = sphi 0, %s63
      %s67 = sphi 0, %s66
      %s83 = sphi 0, %s67
      %s87 = sphi 0, %s87
      %s89 = sphi 0, %s87
      %s90 = sphi 0, %s89
      %s104 = sphi 0, %s90
      %s108 = sphi 0, %s108
      %s110 = sphi 0, %s108
      %s111 = sphi 0, %s110
      %s125 = sphi 0, %s111
      %s131 = sphi 0, %s133
      %s134 = sphi 0, %s131
      %s135 = sphi 0, %s134
      %s151 = sphi 0, %s135
    $region4: #{tpu_custom_call.1} parent=1 // loop_header_branch
      %16 = sbr.rel (%p14) target = $region8
    $region5: #{tpu_custom_call.1} parent=1 // loop_body
      %s18 = ssub.s32 %s13, 1
      %s19 = ssub.s32 %s13, 2
      %s26 = sadd.s32 1, %s21
      %p27 = scmp.ge.s32.totalorder %s26, 1
      %s28 = scalar_select %p27, 0, %s26
      %s29 = sadd.s32 1, %s20
      %s30 = scalar_select %p27, %s29, %s20
      %p31 = scmp.ge.s32.totalorder %s30, 2
      %s32 = scalar_select %p31, 0, %s30
      %s33 = ssub.s32 %s20, %s32
      %s34 = ssub.s32 %s21, %s28
      %s35 = sor.u32 %s33, %s34
      %p36 = scmp.eq.s32.totalorder %s35, 0
      %s38 = sadd.s32 %s37, 1
      %s39 = scalar_select %p36, %s37, %s38
      %p42 = pneg %p36
      %p43 = scmp.eq.s32.totalorder %s13, 1
      %p44 = por %p42, %p43
      %p45 = scmp.ne.s32.totalorder %s37, %s40
      %p46 = scmp.eq.s32.totalorder %s13, 0
      %p47 = por %p45, %p46
      %p48 = scmp.ne.s32.totalorder %s37, %s40
      %p49 = scmp.eq.s32.totalorder %s18, 1
      %p50 = por %p48, %p49
      %p51 = scmp.ne.s32.totalorder %s40, %s41
      %p52 = scmp.eq.s32.totalorder %s18, 0
      %p53 = por %p51, %p52
      %p54 = scmp.ne.s32.totalorder %s40, %s41
      %p55 = scmp.eq.s32.totalorder %s19, 1
      %p56 = por %p54, %p55
      %p58 = scmp.ne.s32.totalorder %s41, %s57
      %p59 = scmp.eq.s32.totalorder %s19, 0
      %p60 = por %p58, %p59
      %s61 = ssub.s32 %s21, %s28
      %p62 = scmp.eq.s32.totalorder %s61, 0
      %s64 = sadd.s32 %s63, 1
      %s65 = scalar_select %p62, %s63, %s64
      %p68 = pneg %p62
      %p69 = scmp.eq.s32.totalorder %s13, 1
      %p70 = por %p68, %p69
      %p71 = scmp.ne.s32.totalorder %s63, %s66
      %p72 = scmp.eq.s32.totalorder %s13, 0
      %p73 = por %p71, %p72
      %p74 = scmp.ne.s32.totalorder %s63, %s66
      %p75 = scmp.eq.s32.totalorder %s18, 1
      %p76 = por %p74, %p75
      %p77 = scmp.ne.s32.totalorder %s66, %s67
      %p78 = scmp.eq.s32.totalorder %s18, 0
      %p79 = por %p77, %p78
      %p80 = scmp.ne.s32.totalorder %s66, %s67
      %p81 = scmp.eq.s32.totalorder %s19, 1
      %p82 = por %p80, %p81
      %p84 = scmp.ne.s32.totalorder %s67, %s83
      %p85 = scmp.eq.s32.totalorder %s19, 0
      %p86 = por %p84, %p85
      %s88 = sadd.s32 %s87, 1
      %p91 = scmp.eq.s32.totalorder %s13, 1
      %p92 = scmp.ne.s32.totalorder %s87, %s89
      %p93 = scmp.eq.s32.totalorder %s13, 0
      %p94 = por %p92, %p93
      %p95 = scmp.ne.s32.totalorder %s87, %s89
      %p96 = scmp.eq.s32.totalorder %s18, 1
      %p97 = por %p95, %p96
      %p98 = scmp.ne.s32.totalorder %s89, %s90
      %p99 = scmp.eq.s32.totalorder %s18, 0
      %p100 = por %p98, %p99
      %p101 = scmp.ne.s32.totalorder %s89, %s90
      %p102 = scmp.eq.s32.totalorder %s19, 1
      %p103 = por %p101, %p102
      %p105 = scmp.ne.s32.totalorder %s90, %s104
      %p106 = scmp.eq.s32.totalorder %s19, 0
      %p107 = por %p105, %p106
      %s109 = sadd.s32 %s108, 1
      %p112 = scmp.eq.s32.totalorder %s13, 1
      %p113 = scmp.ne.s32.totalorder %s108, %s110
      %p114 = scmp.eq.s32.totalorder %s13, 0
      %p115 = por %p113, %p114
      %p116 = scmp.ne.s32.totalorder %s108, %s110
      %p117 = scmp.eq.s32.totalorder %s18, 1
      %p118 = por %p116, %p117
      %p119 = scmp.ne.s32.totalorder %s110, %s111
      %p120 = scmp.eq.s32.totalorder %s18, 0
      %p121 = por %p119, %p120
      %p122 = scmp.ne.s32.totalorder %s110, %s111
      %p123 = scmp.eq.s32.totalorder %s19, 1
      %p124 = por %p122, %p123
      %p126 = scmp.ne.s32.totalorder %s111, %s125
      %p127 = scmp.eq.s32.totalorder %s19, 0
      %p128 = por %p126, %p127
      %s129 = ssub.s32 %s20, %s32
      %p130 = scmp.eq.s32.totalorder %s129, 0
      %s132 = sadd.s32 %s131, 1
      %s133 = scalar_select %p130, %s131, %s132
      %p136 = pneg %p130
      %p137 = scmp.eq.s32.totalorder %s13, 1
      %p138 = por %p136, %p137
      %p139 = scmp.ne.s32.totalorder %s131, %s134
      %p140 = scmp.eq.s32.totalorder %s13, 0
      %p141 = por %p139, %p140
      %p142 = scmp.ne.s32.totalorder %s131, %s134
      %p143 = scmp.eq.s32.totalorder %s18, 1
      %p144 = por %p142, %p143
      %p145 = scmp.ne.s32.totalorder %s134, %s135
      %p146 = scmp.eq.s32.totalorder %s18, 0
      %p147 = por %p145, %p146
      %p148 = scmp.ne.s32.totalorder %s134, %s135
      %p149 = scmp.eq.s32.totalorder %s19, 1
      %p150 = por %p148, %p149
      %p152 = scmp.ne.s32.totalorder %s135, %s151
      %p153 = scmp.eq.s32.totalorder %s19, 0
      %p154 = por %p152, %p153
      %p155 = scmp.le.s32.totalorder 1, %s13
      %p156 = scmp.lt.s32.totalorder %s13, 3
      %p157 = pnand %p155, %p156
      %p158 = pneg %p157
      // Predicated region
      $region9: #{tpu_custom_call.1} parent=5 // pred_check
        _
      $region10: #{tpu_custom_call.1} parent=5 // pred_check_branch
        %160 = sbr.rel (%p157) target = $region12
      $region11: #{tpu_custom_call.1} parent=5 // pred_region
        %s161 = ssub.s32 %s13, 1
        // Predicated region
        $region13: #{tpu_custom_call.1} parent=11 // pred_check
          %p162 = pneg %p79
        $region14: #{tpu_custom_call.1} parent=11 // pred_check_branch
          %164 = sbr.rel (%p162) target = $region16
        $region15: #{tpu_custom_call.1} parent=11 // pred_region
          %s165 = smul.u32 16, %s23
          %p166 = scmp.lt.s32.totalorder %s165, 15
          %s167 = scalar_select %p166, %s165, 15
          %s168 = smul.addr %s167, 8
          %s169 = scalar_lea.vmem %s1, %s168
          %s170 = smul.u32 16, %s23
        $region16: #{tpu_custom_call.1} parent=11 // pred_fallthru
          _
        // Predicated region
        $region17: #{tpu_custom_call.1} parent=11 // pred_check
          %p171 = pneg %p100
        $region18: #{tpu_custom_call.1} parent=11 // pred_check_branch
          %173 = sbr.rel (%p171) target = $region20
        $region19: #{tpu_custom_call.1} parent=11 // pred_region
          _
        $region20: #{tpu_custom_call.1} parent=11 // pred_fallthru
          _
        // Predicated region
        $region21: #{tpu_custom_call.1} parent=11 // pred_check
          %p174 = pneg %p121
        $region22: #{tpu_custom_call.1} parent=11 // pred_check_branch
          %176 = sbr.rel (%p174) target = $region24
        $region23: #{tpu_custom_call.1} parent=11 // pred_region
          _
        $region24: #{tpu_custom_call.1} parent=11 // pred_fallthru
          _
      $region12: #{tpu_custom_call.1} parent=5 // pred_fallthru
        _
      %p177 = scmp.lt.s32.totalorder %s13, 2
      // Predicated region
      $region25: #{tpu_custom_call.1} parent=5 // pred_check
        %p178 = pneg %p177
      $region26: #{tpu_custom_call.1} parent=5 // pred_check_branch
        %180 = sbr.rel (%p178) target = $region28
      $region27: #{tpu_custom_call.1} parent=5 // pred_region
        // Predicated region
        $region29: #{tpu_custom_call.1} parent=27 // pred_check
          %p181 = pneg %p47
        $region30: #{tpu_custom_call.1} parent=27 // pred_check_branch
          %183 = sbr.rel (%p181) target = $region32
        $region31: #{tpu_custom_call.1} parent=27 // pred_region
          %s184 = smul.u32 8, %s20
          %p185 = scmp.lt.s32.totalorder %s184, 15
          %s186 = scalar_select %p185, %s184, 15
          %p187 = scmp.lt.s32.totalorder %s21, 0
          %s188 = scalar_select %p187, %s21, 0
          %s189 = sadd.s32 %s188, %s186
          %s190 = smul.addr %s189, 8
          %s191 = scalar_lea.vmem %s0, %s190
          %s192 = smul.u32 8, %s20
        $region32: #{tpu_custom_call.1} parent=27 // pred_fallthru
          _
      $region28: #{tpu_custom_call.1} parent=5 // pred_fallthru
        _
      %p193 = scmp.le.s32.totalorder 1, %s13
      %p194 = scmp.lt.s32.totalorder %s13, 3
      %p195 = pnand %p193, %p194
      %p196 = pneg %p195
      // Predicated region
      $region33: #{tpu_custom_call.1} parent=5 // pred_check
        _
      $region34: #{tpu_custom_call.1} parent=5 // pred_check_branch
        %198 = sbr.rel (%p195) target = $region36
      $region35: #{tpu_custom_call.1} parent=5 // pred_region
        %s199 = ssub.s32 %s13, 1
        %s200 = smul.u32 8, %s22
        %p201 = scmp.lt.s32.totalorder %s200, 15
        %s202 = scalar_select %p201, %s200, 15
        %p203 = scmp.lt.s32.totalorder %s23, 0
        %s204 = scalar_select %p203, %s23, 0
        %s205 = sadd.s32 %s204, %s202
        %s206 = smul.addr %s205, 8
        %s207 = scalar_lea.vmem %s0, %s206
        %p208 = pneg %p53
        %p209 = pneg %p50
        %s210 = smul.u32 16, %s23
        %p211 = scmp.lt.s32.totalorder %s210, 15
        %s212 = scalar_select %p211, %s210, 15
        %s213 = smul.addr %s212, 8
        %s214 = scalar_lea.vmem %s1, %s213
        %p215 = pneg %p79
        %p216 = pneg %p76
        %p217 = pneg %p100
        %p218 = pneg %p97
        %p219 = pneg %p121
        %p220 = pneg %p118
        %p221 = pneg %p147
        %p222 = pneg %p144
        %s223 = sand.u32 %s134, 1
        %s224 = scalar_lea.sflag [#allocation3], %s223
        %s225 = sand.u32 %s134, 1
        %s226 = smul.addr %s225, 64
        %s227 = scalar_lea.vmem [#allocation2], %s226
        %s228 = smul.u32 8, %s22
        %p229 = scmp.lt.s32.totalorder %s228, 15
        %s230 = scalar_select %p229, %s228, 15
        %p231 = scmp.lt.s32.totalorder %s23, 0
        %s232 = scalar_select %p231, %s23, 0
        %s233 = sadd.s32 %s232, %s230
        %s234 = smul.addr %s233, 8
        %s235 = scalar_lea.vmem %s0, %s234
        %s236 = smul.u32 8, %s22
        %s237 = smul.u32 16, %s23
        %p238 = scmp.lt.s32.totalorder %s237, 15
        %s239 = scalar_select %p238, %s237, 15
        %s240 = smul.addr %s239, 8
        %s241 = scalar_lea.vmem %s1, %s240
        %s242 = smul.u32 16, %s23
        %s243 = smul.u32 8, %s22
        %p244 = scmp.eq.s32.totalorder %s23, 0
        // Predicated region
        $region37: #{tpu_custom_call.1} parent=35 // pred_check
          %p245 = pneg %p244
        $region38: #{tpu_custom_call.1} parent=35 // pred_check_branch
          %247 = sbr.rel (%p245) target = $region40
        $region39: #{tpu_custom_call.1} parent=35 // pred_region
          %v248 = vld [vmem:[%s3] sm:$0x1]
          %v250 = vlaneseq
          %v251 = vshrl.u32 %v250, 7
          %v252 = vsub.s32 0, %v251
          %v253 = vrot.slane %v248, %v252
          %255 = vst [vmem:[%s227] sm:$0xff] %v253
          %256 = vst [vmem:[%s227 + $0x8] sm:$0xff] %v253
          %257 = vst [vmem:[%s227 + $0x10] sm:$0xff] %v253
          %258 = vst [vmem:[%s227 + $0x18] sm:$0xff] %v253
          %259 = vst [vmem:[%s227 + $0x20] sm:$0xff] %v253
          %260 = vst [vmem:[%s227 + $0x28] sm:$0xff] %v253
          %261 = vst [vmem:[%s227 + $0x30] sm:$0xff] %v253
          %262 = vst [vmem:[%s227 + $0x38] sm:$0xff] %v253
        $region40: #{tpu_custom_call.1} parent=35 // pred_fallthru
          _
        %v263 = vld [vmem:[%s241] sm:$0xff]
        %v264 = vld [vmem:[%s241 + $0x8] sm:$0xff]
        %v265 = vld [vmem:[%s241 + $0x10] sm:$0xff]
        %v266 = vld [vmem:[%s241 + $0x18] sm:$0xff]
        %v267 = vld [vmem:[%s241 + $0x20] sm:$0xff]
        %v268 = vld [vmem:[%s241 + $0x28] sm:$0xff]
        %v269 = vld [vmem:[%s241 + $0x30] sm:$0xff]
        %v270 = vld [vmem:[%s241 + $0x38] sm:$0xff]
        %v271 = vld [vmem:[%s241 + $0x40] sm:$0xff]
        %v272 = vld [vmem:[%s241 + $0x48] sm:$0xff]
        %v273 = vld [vmem:[%s241 + $0x50] sm:$0xff]
        %v274 = vld [vmem:[%s241 + $0x58] sm:$0xff]
        %v275 = vld [vmem:[%s241 + $0x60] sm:$0xff]
        %v276 = vld [vmem:[%s241 + $0x68] sm:$0xff]
        %v277 = vld [vmem:[%s241 + $0x70] sm:$0xff]
        %v278 = vld [vmem:[%s241 + $0x78] sm:$0xff]
        %v279 = vld [vmem:[%s2] sm:$0xff]
        %v280 = vld [vmem:[%s2 + $0x8] sm:$0xff]
        %vm281 = vcmask 130048
        %v283 = vsel %vm281, %v263, 0
        %v286 = vsel %vm281, %v264, 0
        %v289 = vsel %vm281, %v265, 0
        %v292 = vsel %vm281, %v266, 0
        %v295 = vsel %vm281, %v267, 0
        %v298 = vsel %vm281, %v268, 0
        %v301 = vsel %vm281, %v269, 0
        %v304 = vsel %vm281, %v270, 0
        %v307 = vsel %vm281, %v271, 0
        %v310 = vsel %vm281, %v272, 0
        %v313 = vsel %vm281, %v273, 0
        %v316 = vsel %vm281, %v274, 0
        %v319 = vsel %vm281, %v275, 0
        %v322 = vsel %vm281, %v276, 0
        %v325 = vsel %vm281, %v277, 0
        %v328 = vsel %vm281, %v278, 0
        %330 = vmatprep.subr.mxu0 0.0
        %331 = vmatpush1.msra.mxu0 %v279
        %332 = vmatprep.subr.mxu0 0.0
        %333 = vmatpush1.msra.mxu0 %v280
        %334 = vmatprep.subr.mxu0 0.0
        %335 = vmatpush1.msra.mxu0 0.0
        %336 = vmatprep.subr.mxu0 0.0
        %337 = vmatpush1.msra.mxu0 0.0
        %338 = vmatprep.subr.mxu0 0.0
        %339 = vmatpush1.msra.mxu0 0.0
        %340 = vmatprep.subr.mxu0 0.0
        %341 = vmatpush1.msra.mxu0 0.0
        %342 = vmatprep.subr.mxu0 0.0
        %343 = vmatpush1.msra.mxu0 0.0
        %344 = vmatprep.subr.mxu0 0.0
        %345 = vmatpush1.msra.mxu0 0.0
        %346 = vmatprep.subr.mxu0 0.0
        %347 = vmatpush1.msra.mxu0 0.0
        %348 = vmatprep.subr.mxu0 0.0
        %349 = vmatpush1.msra.mxu0 0.0
        %350 = vmatprep.subr.mxu0 0.0
        %351 = vmatpush1.msra.mxu0 0.0
        %352 = vmatprep.subr.mxu0 0.0
        %353 = vmatpush1.msra.mxu0 0.0
        %354 = vmatprep.subr.mxu0 0.0
        %355 = vmatpush1.msra.mxu0 0.0
        %356 = vmatprep.subr.mxu0 0.0
        %357 = vmatpush1.msra.mxu0 0.0
        %358 = vmatprep.subr.mxu0 0.0
        %359 = vmatpush1.msra.mxu0 0.0
        %360 = vmatprep.subr.mxu0 0.0
        %361 = vmatpush1.msra.mxu0 0.0
        %362 = vmatprep.subr.mxu0 0.0
        %363 = vmatpush1.msra.mxu0 0.0
        %364 = vmatprep.subr.mxu0 0.0
        %365 = vmatpush1.msra.mxu0 0.0
        %366 = vmatprep.subr.mxu0 0.0
        %367 = vmatpush1.msra.mxu0 0.0
        %368 = vmatprep.subr.mxu0 0.0
        %369 = vmatpush1.msra.mxu0 0.0
        %370 = vmatprep.subr.mxu0 0.0
        %371 = vmatpush1.msra.mxu0 0.0
        %372 = vmatprep.subr.mxu0 0.0
        %373 = vmatpush1.msra.mxu0 0.0
        %374 = vmatprep.subr.mxu0 0.0
        %375 = vmatpush1.msra.mxu0 0.0
        %376 = vmatprep.subr.mxu0 0.0
        %377 = vmatpush1.msra.mxu0 0.0
        %378 = vmatprep.subr.mxu0 0.0
        %379 = vmatpush1.msra.mxu0 0.0
        %380 = vmatprep.subr.mxu0 0.0
        %381 = vmatpush1.msra.mxu0 0.0
        %382 = vmatprep.subr.mxu0 0.0
        %383 = vmatpush1.msra.mxu0 0.0
        %384 = vmatprep.subr.mxu0 0.0
        %385 = vmatpush1.msra.mxu0 0.0
        %386 = vmatprep.subr.mxu0 0.0
        %387 = vmatpush1.msra.mxu0 0.0
        %388 = vmatprep.subr.mxu0 0.0
        %389 = vmatpush1.msra.mxu0 0.0
        %390 = vmatprep.subr.mxu0 0.0
        %391 = vmatpush1.msra.mxu0 0.0
        %392 = vmatprep.subr.mxu0 0.0
        %393 = vmatpush1.msra.mxu0 0.0
        %394 = vmatprep.mubr.f32.mxu0 0.0
        %395 = vmatmul.mubr.f32.gmra.mrb[0].mxu0 %v283
        %v396 = vpop.f32.mrb[0].mxu0
        %v397 = vadd.f32 0.0, %v396
        %v398 = vpop.f32.mrb[0].mxu0
        %399 = vmatprep.mubr.f32.mxu0 0.0
        %400 = vmatmul.mubr.f32.gmra.mrb[0].mxu0 %v286
        %v401 = vpop.f32.mrb[0].mxu0
        %v402 = vadd.f32 0.0, %v401
        %v403 = vpop.f32.mrb[0].mxu0
        %404 = vmatprep.mubr.f32.mxu0 0.0
        %405 = vmatmul.mubr.f32.gmra.mrb[0].mxu0 %v289
        %v406 = vpop.f32.mrb[0].mxu0
        %v407 = vadd.f32 0.0, %v406
        %v408 = vpop.f32.mrb[0].mxu0
        %409 = vmatprep.mubr.f32.mxu0 0.0
        %410 = vmatmul.mubr.f32.gmra.mrb[0].mxu0 %v292
        %v411 = vpop.f32.mrb[0].mxu0
        %v412 = vadd.f32 0.0, %v411
        %v413 = vpop.f32.mrb[0].mxu0
        %414 = vmatprep.mubr.f32.mxu0 0.0
        %415 = vmatmul.mubr.f32.gmra.mrb[0].mxu0 %v295
        %v416 = vpop.f32.mrb[0].mxu0
        %v417 = vadd.f32 0.0, %v416
        %v418 = vpop.f32.mrb[0].mxu0
        %419 = vmatprep.mubr.f32.mxu0 0.0
        %420 = vmatmul.mubr.f32.gmra.mrb[0].mxu0 %v298
        %v421 = vpop.f32.mrb[0].mxu0
        %v422 = vadd.f32 0.0, %v421
        %v423 = vpop.f32.mrb[0].mxu0
        %424 = vmatprep.mubr.f32.mxu0 0.0
        %425 = vmatmul.mubr.f32.gmra.mrb[0].mxu0 %v301
        %v426 = vpop.f32.mrb[0].mxu0
        %v427 = vadd.f32 0.0, %v426
        %v428 = vpop.f32.mrb[0].mxu0
        %429 = vmatprep.mubr.f32.mxu0 0.0
        %430 = vmatmul.mubr.f32.gmra.mrb[0].mxu0 %v304
        %v431 = vpop.f32.mrb[0].mxu0
        %v432 = vadd.f32 0.0, %v431
        %v433 = vpop.f32.mrb[0].mxu0
        %434 = vmatprep.mubr.f32.mxu0 0.0
        %435 = vmatmul.mubr.f32.gmra.mrb[0].mxu0 %v307
        %v436 = vpop.f32.mrb[0].mxu0
        %v437 = vadd.f32 0.0, %v436
        %v438 = vpop.f32.mrb[0].mxu0
        %439 = vmatprep.mubr.f32.mxu0 0.0
        %440 = vmatmul.mubr.f32.gmra.mrb[0].mxu0 %v310
        %v441 = vpop.f32.mrb[0].mxu0
        %v442 = vadd.f32 0.0, %v441
        %v443 = vpop.f32.mrb[0].mxu0
        %444 = vmatprep.mubr.f32.mxu0 0.0
        %445 = vmatmul.mubr.f32.gmra.mrb[0].mxu0 %v313
        %v446 = vpop.f32.mrb[0].mxu0
        %v447 = vadd.f32 0.0, %v446
        %v448 = vpop.f32.mrb[0].mxu0
        %449 = vmatprep.mubr.f32.mxu0 0.0
        %450 = vmatmul.mubr.f32.gmra.mrb[0].mxu0 %v316
        %v451 = vpop.f32.mrb[0].mxu0
        %v452 = vadd.f32 0.0, %v451
        %v453 = vpop.f32.mrb[0].mxu0
        %454 = vmatprep.mubr.f32.mxu0 0.0
        %455 = vmatmul.mubr.f32.gmra.mrb[0].mxu0 %v319
        %v456 = vpop.f32.mrb[0].mxu0
        %v457 = vadd.f32 0.0, %v456
        %v458 = vpop.f32.mrb[0].mxu0
        %459 = vmatprep.mubr.f32.mxu0 0.0
        %460 = vmatmul.mubr.f32.gmra.mrb[0].mxu0 %v322
        %v461 = vpop.f32.mrb[0].mxu0
        %v462 = vadd.f32 0.0, %v461
        %v463 = vpop.f32.mrb[0].mxu0
        %464 = vmatprep.mubr.f32.mxu0 0.0
        %465 = vmatmul.mubr.f32.gmra.mrb[0].mxu0 %v325
        %v466 = vpop.f32.mrb[0].mxu0
        %v467 = vadd.f32 0.0, %v466
        %v468 = vpop.f32.mrb[0].mxu0
        %469 = vmatprep.mubr.f32.mxu0 0.0
        %470 = vmatmul.mubr.f32.gmra.mrb[0].mxu0 %v328
        %v471 = vpop.f32.mrb[0].mxu0
        %v472 = vadd.f32 0.0, %v471
        %v473 = vpop.f32.mrb[0].mxu0
        %474 = vdwg.mxu0
        %v475 = vld [vmem:[%s227] sm:$0xff]
        %v476 = vld [vmem:[%s227 + $0x8] sm:$0xff]
        %v477 = vld [vmem:[%s227 + $0x10] sm:$0xff]
        %v478 = vld [vmem:[%s227 + $0x18] sm:$0xff]
        %v479 = vld [vmem:[%s227 + $0x20] sm:$0xff]
        %v480 = vld [vmem:[%s227 + $0x28] sm:$0xff]
        %v481 = vld [vmem:[%s227 + $0x30] sm:$0xff]
        %v482 = vld [vmem:[%s227 + $0x38] sm:$0xff]
        %v483 = vld [vmem:[%s235] sm:$0xff]
        %v484 = vld [vmem:[%s235 + $0x8] sm:$0xff]
        %v485 = vld [vmem:[%s235 + $0x10] sm:$0xff]
        %v486 = vld [vmem:[%s235 + $0x18] sm:$0xff]
        %v487 = vld [vmem:[%s235 + $0x20] sm:$0xff]
        %v488 = vld [vmem:[%s235 + $0x28] sm:$0xff]
        %v489 = vld [vmem:[%s235 + $0x30] sm:$0xff]
        %v490 = vld [vmem:[%s235 + $0x38] sm:$0xff]
        %491 = vmatprep.subr.mxu0 0.0
        %492 = vmatpush1.msra.mxu0 %v397
        %493 = vmatprep.subr.mxu0 0.0
        %494 = vmatpush1.msra.mxu0 %v402
        %495 = vmatprep.subr.mxu0 0.0
        %496 = vmatpush1.msra.mxu0 %v407
        %497 = vmatprep.subr.mxu0 0.0
        %498 = vmatpush1.msra.mxu0 %v412
        %499 = vmatprep.subr.mxu0 0.0
        %500 = vmatpush1.msra.mxu0 %v417
        %501 = vmatprep.subr.mxu0 0.0
        %502 = vmatpush1.msra.mxu0 %v422
        %503 = vmatprep.subr.mxu0 0.0
        %504 = vmatpush1.msra.mxu0 %v427
        %505 = vmatprep.subr.mxu0 0.0
        %506 = vmatpush1.msra.mxu0 %v432
        %507 = vmatprep.subr.mxu0 0.0
        %508 = vmatpush1.msra.mxu0 %v437
        %509 = vmatprep.subr.mxu0 0.0
        %510 = vmatpush1.msra.mxu0 %v442
        %511 = vmatprep.subr.mxu0 0.0
        %512 = vmatpush1.msra.mxu0 %v447
        %513 = vmatprep.subr.mxu0 0.0
        %514 = vmatpush1.msra.mxu0 %v452
        %515 = vmatprep.subr.mxu0 0.0
        %516 = vmatpush1.msra.mxu0 %v457
        %517 = vmatprep.subr.mxu0 0.0
        %518 = vmatpush1.msra.mxu0 %v462
        %519 = vmatprep.subr.mxu0 0.0
        %520 = vmatpush1.msra.mxu0 %v467
        %521 = vmatprep.subr.mxu0 0.0
        %522 = vmatpush1.msra.mxu0 %v472
        %523 = vmatprep.subr.mxu0 0.0
        %524 = vmatpush1.msra.mxu0 0.0
        %525 = vmatprep.subr.mxu0 0.0
        %526 = vmatpush1.msra.mxu0 0.0
        %527 = vmatprep.subr.mxu0 0.0
        %528 = vmatpush1.msra.mxu0 0.0
        %529 = vmatprep.subr.mxu0 0.0
        %530 = vmatpush1.msra.mxu0 0.0
        %531 = vmatprep.subr.mxu0 0.0
        %532 = vmatpush1.msra.mxu0 0.0
        %533 = vmatprep.subr.mxu0 0.0
        %534 = vmatpush1.msra.mxu0 0.0
        %535 = vmatprep.subr.mxu0 0.0
        %536 = vmatpush1.msra.mxu0 0.0
        %537 = vmatprep.subr.mxu0 0.0
        %538 = vmatpush1.msra.mxu0 0.0
        %539 = vmatprep.subr.mxu0 0.0
        %540 = vmatpush1.msra.mxu0 0.0
        %541 = vmatprep.subr.mxu0 0.0
        %542 = vmatpush1.msra.mxu0 0.0
        %543 = vmatprep.subr.mxu0 0.0
        %544 = vmatpush1.msra.mxu0 0.0
        %545 = vmatprep.subr.mxu0 0.0
        %546 = vmatpush1.msra.mxu0 0.0
        %547 = vmatprep.subr.mxu0 0.0
        %548 = vmatpush1.msra.mxu0 0.0
        %549 = vmatprep.subr.mxu0 0.0
        %550 = vmatpush1.msra.mxu0 0.0
        %551 = vmatprep.subr.mxu0 0.0
        %552 = vmatpush1.msra.mxu0 0.0
        %553 = vmatprep.subr.mxu0 0.0
        %554 = vmatpush1.msra.mxu0 0.0
        %555 = vmatprep.mubr.f32.mxu0 0.0
        %556 = vmatmul.mubr.f32.gmra.mrb[0].mxu0 %v483
        %v557 = vpop.f32.mrb[0].mxu0
        %v558 = vadd.f32 0.0, %v557
        %v559 = vpop.f32.mrb[0].mxu0
        %560 = vmatprep.mubr.f32.mxu0 0.0
        %561 = vmatmul.mubr.f32.gmra.mrb[0].mxu0 %v484
        %v562 = vpop.f32.mrb[0].mxu0
        %v563 = vadd.f32 0.0, %v562
        %v564 = vpop.f32.mrb[0].mxu0
        %565 = vmatprep.mubr.f32.mxu0 0.0
        %566 = vmatmul.mubr.f32.gmra.mrb[0].mxu0 %v485
        %v567 = vpop.f32.mrb[0].mxu0
        %v568 = vadd.f32 0.0, %v567
        %v569 = vpop.f32.mrb[0].mxu0
        %570 = vmatprep.mubr.f32.mxu0 0.0
        %571 = vmatmul.mubr.f32.gmra.mrb[0].mxu0 %v486
        %v572 = vpop.f32.mrb[0].mxu0
        %v573 = vadd.f32 0.0, %v572
        %v574 = vpop.f32.mrb[0].mxu0
        %575 = vmatprep.mubr.f32.mxu0 0.0
        %576 = vmatmul.mubr.f32.gmra.mrb[0].mxu0 %v487
        %v577 = vpop.f32.mrb[0].mxu0
        %v578 = vadd.f32 0.0, %v577
        %v579 = vpop.f32.mrb[0].mxu0
        %580 = vmatprep.mubr.f32.mxu0 0.0
        %581 = vmatmul.mubr.f32.gmra.mrb[0].mxu0 %v488
        %v582 = vpop.f32.mrb[0].mxu0
        %v583 = vadd.f32 0.0, %v582
        %v584 = vpop.f32.mrb[0].mxu0
        %585 = vmatprep.mubr.f32.mxu0 0.0
        %586 = vmatmul.mubr.f32.gmra.mrb[0].mxu0 %v489
        %v587 = vpop.f32.mrb[0].mxu0
        %v588 = vadd.f32 0.0, %v587
        %v589 = vpop.f32.mrb[0].mxu0
        %590 = vmatprep.mubr.f32.mxu0 0.0
        %591 = vmatmul.mubr.f32.gmra.mrb[0].mxu0 %v490
        %v592 = vpop.f32.mrb[0].mxu0
        %v593 = vadd.f32 0.0, %v592
        %v594 = vpop.f32.mrb[0].mxu0
        %595 = vdwg.mxu0
        %v596 = vadd.f32 %v475, %v558
        %v597 = vadd.f32 %v476, %v563
        %v598 = vadd.f32 %v477, %v568
        %v599 = vadd.f32 %v478, %v573
        %v600 = vadd.f32 %v479, %v578
        %v601 = vadd.f32 %v480, %v583
        %v602 = vadd.f32 %v481, %v588
        %v603 = vadd.f32 %v482, %v593
        %604 = vst [vmem:[%s227] sm:$0xff] %v596
        %605 = vst [vmem:[%s227 + $0x8] sm:$0xff] %v597
        %606 = vst [vmem:[%s227 + $0x10] sm:$0xff] %v598
        %607 = vst [vmem:[%s227 + $0x18] sm:$0xff] %v599
        %608 = vst [vmem:[%s227 + $0x20] sm:$0xff] %v600
        %609 = vst [vmem:[%s227 + $0x28] sm:$0xff] %v601
        %610 = vst [vmem:[%s227 + $0x30] sm:$0xff] %v602
        %611 = vst [vmem:[%s227 + $0x38] sm:$0xff] %v603
        // Predicated region
        $region41: #{tpu_custom_call.1} parent=35 // pred_check
          %p612 = pneg %p244
        $region42: #{tpu_custom_call.1} parent=35 // pred_check_branch
          %614 = sbr.rel (%p612) target = $region44
        $region43: #{tpu_custom_call.1} parent=35 // pred_region
          %v615 = vld [vmem:[%s227] sm:$0xff]
          %v616 = vld [vmem:[%s227 + $0x8] sm:$0xff]
          %v617 = vld [vmem:[%s227 + $0x10] sm:$0xff]
          %v618 = vld [vmem:[%s227 + $0x18] sm:$0xff]
          %v619 = vld [vmem:[%s227 + $0x20] sm:$0xff]
          %v620 = vld [vmem:[%s227 + $0x28] sm:$0xff]
          %v621 = vld [vmem:[%s227 + $0x30] sm:$0xff]
          %v622 = vld [vmem:[%s227 + $0x38] sm:$0xff]
          %v623 = vmax.f32 %v615, 0.0
          %v624 = vmax.f32 %v616, 0.0
          %v625 = vmax.f32 %v617, 0.0
          %v626 = vmax.f32 %v618, 0.0
          %v627 = vmax.f32 %v619, 0.0
          %v628 = vmax.f32 %v620, 0.0
          %v629 = vmax.f32 %v621, 0.0
          %v630 = vmax.f32 %v622, 0.0
          %631 = vst [vmem:[%s227] sm:$0xff] %v623
          %632 = vst [vmem:[%s227 + $0x8] sm:$0xff] %v624
          %633 = vst [vmem:[%s227 + $0x10] sm:$0xff] %v625
          %634 = vst [vmem:[%s227 + $0x18] sm:$0xff] %v626
          %635 = vst [vmem:[%s227 + $0x20] sm:$0xff] %v627
          %636 = vst [vmem:[%s227 + $0x28] sm:$0xff] %v628
          %637 = vst [vmem:[%s227 + $0x30] sm:$0xff] %v629
          %638 = vst [vmem:[%s227 + $0x38] sm:$0xff] %v630
        $region44: #{tpu_custom_call.1} parent=35 // pred_fallthru
          _
        %s639 = sand.u32 %s134, 1
        %s640 = scalar_lea.sflag [#allocation3], %s639
        %s641 = sand.u32 %s134, 1
        %s642 = smul.addr %s641, 64
        %s643 = scalar_lea.vmem [#allocation2], %s642
        // Predicated region
        $region45: #{tpu_custom_call.1} parent=35 // pred_check
          %p644 = pneg %p144
        $region46: #{tpu_custom_call.1} parent=35 // pred_check_branch
          %646 = sbr.rel (%p644) target = $region48
        $region47: #{tpu_custom_call.1} parent=35 // pred_region
          %s647 = smul.u32 8, %s22
          %s649 = ssub.s32 1024, 1024
          %650 = vsyncadd %s640, %s649
          %s651 = smul.addr %s647, 128
          %s652 = scalar_lea.hbm %s4, %s651
          %s653 = sshll.u32 %s643, 4
          %s654 = int_to_ptr.vmem [resolvable:$true] %s653
          %659 = dma.vmem_to_hbm [thread:$0]  %s654, 1024, %s652, %s640, 128, 128, 8
        $region48: #{tpu_custom_call.1} parent=35 // pred_fallthru
          _
      $region36: #{tpu_custom_call.1} parent=5 // pred_fallthru
        _
      %p660 = scmp.le.s32.totalorder 2, %s13
      // Predicated region
      $region49: #{tpu_custom_call.1} parent=5 // pred_check
        %p661 = pneg %p660
      $region50: #{tpu_custom_call.1} parent=5 // pred_check_branch
        %663 = sbr.rel (%p661) target = $region52
      $region51: #{tpu_custom_call.1} parent=5 // pred_region
        %s664 = ssub.s32 %s13, 2
        // Predicated region
        $region53: #{tpu_custom_call.1} parent=51 // pred_check
          %p665 = pneg %p150
        $region54: #{tpu_custom_call.1} parent=51 // pred_check_branch
          %667 = sbr.rel (%p665) target = $region56
        $region55: #{tpu_custom_call.1} parent=51 // pred_region
          %s668 = sand.u32 %s135, 1
          %s669 = scalar_lea.sflag [#allocation3], %s668
          %s670 = sand.u32 %s135, 1
          %s671 = smul.addr %s670, 64
          %s672 = scalar_lea.vmem [#allocation2], %s671
          %673 = dma.done %s669, 1024
        $region56: #{tpu_custom_call.1} parent=51 // pred_fallthru
          _
      $region52: #{tpu_custom_call.1} parent=5 // pred_fallthru
        _
    $region6: #{tpu_custom_call.1} parent=1 // loop_footer
      %s17 = sadd.s32 1, %s13
    $region7: #{tpu_custom_call.1} parent=1 // loop_footer_branch
      %12 = sbr.rel target = $region3
    $region8: #{tpu_custom_call.1} parent=1 // loop_exit
      _
    %674 = vsyncpa [#allocation3], 1
    %s675 = scalar_lea.sflag [#allocation3], 1
    %676 = vsyncpa %s675, 1

</llo_original>
